<compile_context>
chip_gen: v7x
topology: tpu7x:2x2x1
jax: 0.10.0
libtpu: 0.0.40
codegen_flags: <defaults>
</compile_context>

<pallas_src>
import functools

import jax
import jax.numpy as jnp
from jax import lax
from jax.experimental import pallas as pl
from jax.experimental.pallas import tpu as pltpu

HIDDEN = 256  # GCN_liner_theta_1 output width (fixed by the module)


# ------------------------------------------------------------------ stage 1
def _prep_kernel(h_ref, gamma_ref, beta_ref, w_t_ref, b_t_ref,
                 w_o_ref, b_o_ref, hx_ref, ho_ref):
    """BatchNorm1d (training-mode stats) + the two Linear layers.

    Outputs:
      hx_ref : (N, 256)     bf16  H_xx1 (MXU-ready operand for the gram matmul)
      ho_ref : (N, out_dim) f32   GCN_liner_out_1(H)
    """
    H = h_ref[...]                                               # (N, C) f32
    mean = jnp.mean(H, axis=0, keepdims=True)                    # (1, C)
    var = jnp.mean((H - mean) ** 2, axis=0, keepdims=True)       # biased variance
    Hn = (H - mean) * lax.rsqrt(var + 1e-5)
    Hn = Hn * gamma_ref[...] + beta_ref[...]

    hx = jnp.dot(Hn, w_t_ref[...], preferred_element_type=jnp.float32) + b_t_ref[...]
    hx_ref[...] = hx.astype(jnp.bfloat16)                        # bf16 for the gram matmul
    ho_ref[...] = (jnp.dot(Hn, w_o_ref[...], preferred_element_type=jnp.float32)
                   + b_o_ref[...])
    # TODO(synk): tile this stage (two-pass mean/var) if N*HIDDEN ever outgrows VMEM.


# ------------------------------------------------------------------ stage 2
def _adj_kernel(hx_ref, a_in_ref, a_ref, d_ref, *, block_n):
    """Per row block: A = sigmoid(Hx Hx^T) * A_in + I and d = rsqrt(rowsum(A))."""
    i = pl.program_id(0)
    row0 = pl.multiple_of(i * block_n, block_n)
    hx_blk = hx_ref[pl.ds(row0, block_n), :]                     # (TN, 256) bf16

    # Gram matmul with the transpose folded into the MXU operand (no .T / XLU pass).
    z = lax.dot_general(hx_blk, hx_ref[...],
                        dimension_numbers=(((1,), (1,)), ((), ())),
                        preferred_element_type=jnp.float32)      # (TN, N) f32

    # sigmoid(z) = 1 / (1 + exp(-z)); EUP exp + approx EUP reciprocal (cheap slot).
    s = pl.reciprocal(1.0 + jnp.exp(-z), approx=True)
    m = s * a_in_ref[...]                                        # sigmoid(Hx Hx^T) * A_in

    # Identity contributes exactly +1 to every rowsum -> fold it analytically.
    d_ref[...] = lax.rsqrt(jnp.sum(m, axis=1, keepdims=True) + 1.0)

    # Store A = m, then add +I only on the (block_n, block_n) diagonal sub-block
    # (no full-width iota temps).
    a_ref[...] = m
    eye = (lax.broadcasted_iota(jnp.int32, (block_n, block_n), 0)
           == lax.broadcasted_iota(jnp.int32, (block_n, block_n), 1)
           ).astype(jnp.float32)
    diag = pl.ds(row0, block_n)
    a_ref[:, diag] = a_ref[:, diag] + eye


# ------------------------------------------------------------------ stage 3
def _prop_kernel(a_ref, d_ref, hod_ref, out_ref):
    """out = LeakyReLU(diag(d_blk) @ A_blk @ hod) per row block (hod = diag(d) @ HO)."""
    y = jnp.dot(a_ref[...].astype(jnp.bfloat16), hod_ref[...],
                preferred_element_type=jnp.float32)              # (TN, out) f32 acc
    y = d_ref[...] * y                                           # left diag(d) scaling
    out_ref[...] = jnp.where(y > 0, y, 0.01 * y)                 # LeakyReLU(0.01)


# ------------------------------------------------------------------ helpers
def _pick_block_n(N):
    """Row-block size: >=2 blocks when N > 128 (v7x megacore), bigger on 128-MiB chips."""
    if N <= 128:
        return N
    target = 128
    try:
        info = pltpu.get_tpu_info()
        # v5e/v6e have 128 MiB VMEM and a single TensorCore -> larger blocks / DMAs.
        if getattr(info, "vmem_capacity_bytes", 0) >= (100 << 20):
            target = 256
    except Exception:
        pass
    bn = target
    while bn > 8 and N % bn != 0:
        bn //= 2
    # Keep the stage-2 per-step working set (~14*bn*N bytes + full Hx) well under
    # v7x's 64-MiB VMEM for very large N.
    while bn > 8 and (14 * bn * N + 4 * N * HIDDEN) > (40 << 20):
        bn //= 2
    return bn if N % bn == 0 else N


# ------------------------------------------------------------------ wrapper
def gcn_layer_small(H, A_in, gamma, beta, W_theta, b_theta, W_out, b_out,
                    *, block_n=None):
    N, _ = H.shape
    out_dim = W_out.shape[1]
    if block_n is None:
        block_n = _pick_block_n(N)
    assert N % block_n == 0 and (block_n % 8 == 0 or block_n == N), \
        "block_n must divide N and be a multiple of 8"
    grid = (N // block_n,)
    n_blocks = N // block_n
    vmem = pl.BlockSpec(memory_space=pltpu.MemorySpace.VMEM)

    # Stage 1: BN + linears (O(N*C) / O(N*256) data; tiny next to the N^2 stages).
    hx, ho = pl.pallas_call(
        _prep_kernel,
        out_shape=(jax.ShapeDtypeStruct((N, HIDDEN), jnp.bfloat16),
                   jax.ShapeDtypeStruct((N, out_dim), jnp.float32)),
        in_specs=[vmem] * 7,
        out_specs=(vmem, vmem),
    )(H, gamma, beta, W_theta, b_theta, W_out, b_out)

    # Explicit VMEM budget (raises 16/32-MiB scoped defaults, safe on 64-MiB v7x).
    est_vmem = max(4 * N * HIDDEN + 14 * block_n * N,
                   10 * block_n * N + 8 * N * out_dim)
    vmem_limit = int(min(48 << 20, max(32 << 20, int(1.3 * est_vmem))))

    # Stage 2: adjacency + degrees, row-blocked grid (megacore-parallel on v7x).
    A, d = pl.pallas_call(
        functools.partial(_adj_kernel, block_n=block_n),
        out_shape=(jax.ShapeDtypeStruct((N, N), jnp.float32),
                   jax.ShapeDtypeStruct((N, 1), jnp.float32)),
        grid=grid,
        in_specs=[pl.BlockSpec((N, HIDDEN), lambda i: (0, 0)),      # full Hx, VMEM-resident
                  pl.BlockSpec((block_n, N), lambda i: (i, 0))],    # A_in row block
        out_specs=(pl.BlockSpec((block_n, N), lambda i: (i, 0)),
                   pl.BlockSpec((block_n, 1), lambda i: (i, 0))),
        compiler_params=pltpu.CompilerParams(
            dimension_semantics=("parallel",),
            vmem_limit_bytes=vmem_limit),
        cost_estimate=pl.CostEstimate(
            flops=2 * N * N * HIDDEN,
            transcendentals=N * N,
            bytes_accessed=8 * N * N + n_blocks * N * HIDDEN * 2 + 4 * N),
    )(hx, A_in)

    # hod = diag(d) @ HO computed once (tiny N x out_dim elementwise op), bf16 for
    # the stage-3 MXU; avoids re-doing it per grid step and avoids streaming the
    # lane-padded (N,1) d as a constant-index block.
    hod = (d * ho).astype(jnp.bfloat16)

    # Stage 3: propagation over A row blocks (A_hat never materialized).
    out = pl.pallas_call(
        _prop_kernel,
        out_shape=jax.ShapeDtypeStruct((N, out_dim), jnp.float32),
        grid=grid,
        in_specs=[pl.BlockSpec((block_n, N), lambda i: (i, 0)),     # A row block
                  pl.BlockSpec((block_n, 1), lambda i: (i, 0)),     # d slice (left scale)
                  pl.BlockSpec((N, out_dim), lambda i: (0, 0))],    # full hod (bf16)
        out_specs=pl.BlockSpec((block_n, out_dim), lambda i: (i, 0)),
        compiler_params=pltpu.CompilerParams(
            dimension_semantics=("parallel",),
            vmem_limit_bytes=vmem_limit),
        cost_estimate=pl.CostEstimate(
            flops=2 * N * N * out_dim,
            transcendentals=0,
            bytes_accessed=4 * N * N + 2 * N * out_dim * (n_blocks + 2) + 4 * N),
    )(A, d, hod)

    return out, A


# ------------------------------------------------------------------ reference
def _reference(H, A_in, gamma, beta, W_theta, b_theta, W_out, b_out):
    # Pure-JAX f32 reference mirroring the PyTorch forward.
    mean = jnp.mean(H, axis=0, keepdims=True)
    var = jnp.mean((H - mean) ** 2, axis=0, keepdims=True)
    Hn = (H - mean) / jnp.sqrt(var + 1e-5) * gamma + beta
    Hx = Hn @ W_theta + b_theta
    A = jax.nn.sigmoid(Hx @ Hx.T) * A_in + jnp.eye(H.shape[0], dtype=jnp.float32)
    d = jnp.sum(A, axis=1) ** -0.5
    A_hat = (d[:, None] * A) * d[None, :]
    out = A_hat @ (Hn @ W_out + b_out)
    out = jnp.where(out > 0, out, 0.01 * out)
    return out, A


if __name__ == "__main__":
    N = 256         # number of graph nodes (multiple of 128 -> lane-dense A stores)
    input_dim = 32
    output_dim = 16

    key = jax.random.PRNGKey(0)
    k_h, k_a, k_wt, k_bt, k_wo, k_bo = jax.random.split(key, 6)

    H = jax.random.normal(k_h, (N, input_dim), dtype=jnp.float32)

    # Nonnegative symmetric adjacency (as a GCN adjacency would be).
    A_raw = jax.random.uniform(k_a, (N, N), dtype=jnp.float32)
    A_in = 0.5 * (A_raw + A_raw.T)

    # BatchNorm1d affine params (PyTorch default init: gamma=1, beta=0).
    gamma = jnp.ones((1, input_dim), dtype=jnp.float32)
    beta = jnp.zeros((1, input_dim), dtype=jnp.float32)

    # Linear layers stored as (in, out) so the kernels compute x @ W + b.
    W_theta = 0.1 * jax.random.normal(k_wt, (input_dim, HIDDEN), dtype=jnp.float32)
    b_theta = 0.1 * jax.random.normal(k_bt, (1, HIDDEN), dtype=jnp.float32)
    W_out = 0.1 * jax.random.normal(k_wo, (input_dim, output_dim), dtype=jnp.float32)
    b_out = 0.1 * jax.random.normal(k_bo, (1, output_dim), dtype=jnp.float32)

    out, A = gcn_layer_small(H, A_in, gamma, beta, W_theta, b_theta, W_out, b_out)
    jax.block_until_ready((out, A))

    out_ref, A_ref = _reference(H, A_in, gamma, beta, W_theta, b_theta, W_out, b_out)
    assert out.shape == (N, output_dim) and A.shape == (N, N)
    # Tolerances accommodate bf16 MXU operands (f32 accumulation) + approx sigmoid.
    assert jnp.allclose(A, A_ref, rtol=2e-2, atol=3e-2), "A mismatch"
    assert jnp.allclose(out, out_ref, rtol=2e-2, atol=2e-2), "out mismatch"

    print("KERNEL_OK")
</pallas_src>

<mosaic_0001>
module attributes {stable_mosaic.version = 11 : i64} {
  func.func @_prep_kernel(%arg0: memref<256x32xf32, #tpu.memory_space<vmem>>, %arg1: memref<1x32xf32, #tpu.memory_space<vmem>>, %arg2: memref<1x32xf32, #tpu.memory_space<vmem>>, %arg3: memref<32x256xf32, #tpu.memory_space<vmem>>, %arg4: memref<1x256xf32, #tpu.memory_space<vmem>>, %arg5: memref<32x16xf32, #tpu.memory_space<vmem>>, %arg6: memref<1x16xf32, #tpu.memory_space<vmem>>, %arg7: memref<256x256xbf16, #tpu.memory_space<vmem>>, %arg8: memref<256x16xf32, #tpu.memory_space<vmem>>) attributes {dimension_semantics = [], scalar_prefetch = 0 : i64, scratch_operands = 0 : i64, tpu.core_type = #tpu.core_type<tc>} {
    %c0 = arith.constant 0 : index
    %c0_0 = arith.constant 0 : index
    %0 = vector.load %arg0[%c0, %c0_0] : memref<256x32xf32, #tpu.memory_space<vmem>>, vector<256x32xf32>
    %cst = arith.constant dense<0.000000e+00> : vector<32xf32>
    %1 = vector.multi_reduction <add>, %0, %cst [0] : vector<256x32xf32> to vector<32xf32>
    %2 = vector.shape_cast %1 : vector<32xf32> to vector<1x32xf32>
    %cst_1 = arith.constant 2.560000e+02 : f32
    %3 = vector.broadcast %cst_1 : f32 to vector<1x32xf32>
    %4 = arith.divf %2, %3 : vector<1x32xf32>
    %5 = vector.broadcast %4 : vector<1x32xf32> to vector<256x32xf32>
    %6 = arith.subf %0, %5 : vector<256x32xf32>
    %7 = arith.mulf %6, %6 : vector<256x32xf32>
    %cst_2 = arith.constant dense<0.000000e+00> : vector<32xf32>
    %8 = vector.multi_reduction <add>, %7, %cst_2 [0] : vector<256x32xf32> to vector<32xf32>
    %9 = vector.shape_cast %8 : vector<32xf32> to vector<1x32xf32>
    %cst_3 = arith.constant 2.560000e+02 : f32
    %10 = vector.broadcast %cst_3 : f32 to vector<1x32xf32>
    %11 = arith.divf %9, %10 : vector<1x32xf32>
    %12 = vector.broadcast %4 : vector<1x32xf32> to vector<256x32xf32>
    %13 = arith.subf %0, %12 : vector<256x32xf32>
    %cst_4 = arith.constant 9.99999974E-6 : f32
    %14 = vector.broadcast %cst_4 : f32 to vector<1x32xf32>
    %15 = arith.addf %11, %14 : vector<1x32xf32>
    %16 = math.rsqrt %15 : vector<1x32xf32>
    %17 = vector.broadcast %16 : vector<1x32xf32> to vector<256x32xf32>
    %18 = arith.mulf %13, %17 : vector<256x32xf32>
    %c0_5 = arith.constant 0 : index
    %c0_6 = arith.constant 0 : index
    %19 = vector.load %arg1[%c0_5, %c0_6] : memref<1x32xf32, #tpu.memory_space<vmem>>, vector<1x32xf32>
    %20 = vector.broadcast %19 : vector<1x32xf32> to vector<256x32xf32>
    %21 = arith.mulf %18, %20 : vector<256x32xf32>
    %c0_7 = arith.constant 0 : index
    %c0_8 = arith.constant 0 : index
    %22 = vector.load %arg2[%c0_7, %c0_8] : memref<1x32xf32, #tpu.memory_space<vmem>>, vector<1x32xf32>
    %23 = vector.broadcast %22 : vector<1x32xf32> to vector<256x32xf32>
    %24 = arith.addf %21, %23 : vector<256x32xf32>
    %c0_9 = arith.constant 0 : index
    %c0_10 = arith.constant 0 : index
    %25 = vector.load %arg3[%c0_9, %c0_10] : memref<32x256xf32, #tpu.memory_space<vmem>>, vector<32x256xf32>
    %cst_11 = arith.constant dense<0.000000e+00> : vector<256x256xf32>
    %26 = tpu.matmul %24, %25, %cst_11 {dimension_numbers = #tpu.dot_dimension_numbers<[1], [0], [0], [1], [0, 0, 1, 1], [], []>} : vector<256x32xf32>, vector<32x256xf32>, vector<256x256xf32> -> vector<256x256xf32>
    %c0_12 = arith.constant 0 : index
    %c0_13 = arith.constant 0 : index
    %27 = vector.load %arg4[%c0_12, %c0_13] : memref<1x256xf32, #tpu.memory_space<vmem>>, vector<1x256xf32>
    %28 = vector.broadcast %27 : vector<1x256xf32> to vector<256x256xf32>
    %29 = arith.addf %26, %28 : vector<256x256xf32>
    %30 = arith.truncf %29 : vector<256x256xf32> to vector<256x256xbf16>
    %c0_14 = arith.constant 0 : index
    %c0_15 = arith.constant 0 : index
    %31 = vector.load %arg7[%c0_14, %c0_15] : memref<256x256xbf16, #tpu.memory_space<vmem>>, vector<256x256xbf16>
    tpu.vector_store %arg7[%c0_14, %c0_15], %30 {strides = array<i32>} : memref<256x256xbf16, #tpu.memory_space<vmem>>, vector<256x256xbf16>,
    %c0_16 = arith.constant 0 : index
    %c0_17 = arith.constant 0 : index
    %32 = vector.load %arg5[%c0_16, %c0_17] : memref<32x16xf32, #tpu.memory_space<vmem>>, vector<32x16xf32>
    %cst_18 = arith.constant dense<0.000000e+00> : vector<256x16xf32>
    %33 = tpu.matmul %24, %32, %cst_18 {dimension_numbers = #tpu.dot_dimension_numbers<[1], [0], [0], [1], [0, 0, 1, 1], [], []>} : vector<256x32xf32>, vector<32x16xf32>, vector<256x16xf32> -> vector<256x16xf32>
    %c0_19 = arith.constant 0 : index
    %c0_20 = arith.constant 0 : index
    %34 = vector.load %arg6[%c0_19, %c0_20] : memref<1x16xf32, #tpu.memory_space<vmem>>, vector<1x16xf32>
    %35 = vector.broadcast %34 : vector<1x16xf32> to vector<256x16xf32>
    %36 = arith.addf %33, %35 : vector<256x16xf32>
    %c0_21 = arith.constant 0 : index
    %c0_22 = arith.constant 0 : index
    %37 = vector.load %arg8[%c0_21, %c0_22] : memref<256x16xf32, #tpu.memory_space<vmem>>, vector<256x16xf32>
    tpu.vector_store %arg8[%c0_21, %c0_22], %36 {strides = array<i32>} : memref<256x16xf32, #tpu.memory_space<vmem>>, vector<256x16xf32>,
    return
  }
}

</mosaic_0001>

<llo_original>
// kernel: tpu_custom_call.1
$region0: #{tpu_custom_call.1}
  #allocation0 [shape = 'u32[]', space=smem, size = 0x4, offset = 0x4, fixed_abs, tag = 'smem constant byte address 0x4 - core index']
  #allocation1 [shape = 'u32[144,128]{1,0:T(1,128)}', space=vmem, size = 0x12000, scoped, tag = 'internal scratch']
  %s0 = inlined_call_operand.vmem [shape: f32[256,32], index: 0, kind: input, shape index: {}]
  %s1 = inlined_call_operand.vmem [shape: f32[1,32], index: 1, kind: input, shape index: {}]
  %s2 = inlined_call_operand.vmem [shape: f32[1,32], index: 2, kind: input, shape index: {}]
  %s3 = inlined_call_operand.vmem [shape: f32[32,256], index: 3, kind: input, shape index: {}]
  %s4 = inlined_call_operand.vmem [shape: f32[1,256], index: 4, kind: input, shape index: {}]
  %s5 = inlined_call_operand.vmem [shape: f32[32,16], index: 5, kind: input, shape index: {}]
  %s6 = inlined_call_operand.vmem [shape: f32[1,16], index: 6, kind: input, shape index: {}]
  %s7 = inlined_call_operand.hbm [shape: bf16[256,256], index: 7, kind: output, shape index: {0}]
  %s8 = inlined_call_operand.vmem [shape: f32[256,16], index: 8, kind: output, shape index: {1}]
  %9 = xla_tuple %s7, %s8
  %s10 = sld [smem:[#allocation0]]
  $region46: #{tpu_custom_call.1} parent=0
    _
  %s12 = ssub.s32 1, %s10
  %s13 = scalar_select 0, %s12, %s10
  $region1: #{tpu_custom_call.1} parent=0
    #allocation2 [shape = 'u8[131072]{0}', space=vmem, size = 0x20000, scoped, tag = 'output window, operand 0, single buffered']
    #allocation3 [shape = 's32[1]{0}', space=sflag, size = 0x4, scoped, tag = 'scoped memory for tpu_custom_call.1']
    %14 = vsyncpa [#allocation3], 0
    // Predicated region
    $region2: #{tpu_custom_call.1} parent=1 // pred_check
      _
    $region3: #{tpu_custom_call.1} parent=1 // pred_check_branch
      %16 = sbr.rel (0) target = $region5
    $region4: #{tpu_custom_call.1} parent=1 // pred_region
      _
    $region5: #{tpu_custom_call.1} parent=1 // pred_fallthru
      _
    // Predicated region
    $region6: #{tpu_custom_call.1} parent=1 // pred_check
      _
    $region7: #{tpu_custom_call.1} parent=1 // pred_check_branch
      %18 = sbr.rel (0) target = $region9
    $region8: #{tpu_custom_call.1} parent=1 // pred_region
      _
    $region9: #{tpu_custom_call.1} parent=1 // pred_fallthru
      _
    // Predicated region
    $region10: #{tpu_custom_call.1} parent=1 // pred_check
      _
    $region11: #{tpu_custom_call.1} parent=1 // pred_check_branch
      %20 = sbr.rel (0) target = $region13
    $region12: #{tpu_custom_call.1} parent=1 // pred_region
      _
    $region13: #{tpu_custom_call.1} parent=1 // pred_fallthru
      _
    // Predicated region
    $region14: #{tpu_custom_call.1} parent=1 // pred_check
      _
    $region15: #{tpu_custom_call.1} parent=1 // pred_check_branch
      %22 = sbr.rel (0) target = $region17
    $region16: #{tpu_custom_call.1} parent=1 // pred_region
      _
    $region17: #{tpu_custom_call.1} parent=1 // pred_fallthru
      _
    // Predicated region
    $region18: #{tpu_custom_call.1} parent=1 // pred_check
      _
    $region19: #{tpu_custom_call.1} parent=1 // pred_check_branch
      %24 = sbr.rel (0) target = $region21
    $region20: #{tpu_custom_call.1} parent=1 // pred_region
      _
    $region21: #{tpu_custom_call.1} parent=1 // pred_fallthru
      _
    // Predicated region
    $region22: #{tpu_custom_call.1} parent=1 // pred_check
      _
    $region23: #{tpu_custom_call.1} parent=1 // pred_check_branch
      %26 = sbr.rel (0) target = $region25
    $region24: #{tpu_custom_call.1} parent=1 // pred_region
      _
    $region25: #{tpu_custom_call.1} parent=1 // pred_fallthru
      _
    // Predicated region
    $region26: #{tpu_custom_call.1} parent=1 // pred_check
      _
    $region27: #{tpu_custom_call.1} parent=1 // pred_check_branch
      %28 = sbr.rel (0) target = $region29
    $region28: #{tpu_custom_call.1} parent=1 // pred_region
      _
    $region29: #{tpu_custom_call.1} parent=1 // pred_fallthru
      _
    %v29 = vld [vmem:[%s0] sm:$0xff]
    %v30 = vld [vmem:[%s0 + $0x8] sm:$0xff]
    %v31 = vld [vmem:[%s0 + $0x10] sm:$0xff]
    %v32 = vld [vmem:[%s0 + $0x18] sm:$0xff]
    %v33 = vld [vmem:[%s0 + $0x20] sm:$0xff]
    %v34 = vld [vmem:[%s0 + $0x28] sm:$0xff]
    %v35 = vld [vmem:[%s0 + $0x30] sm:$0xff]
    %v36 = vld [vmem:[%s0 + $0x38] sm:$0xff]
    %v37 = vld [vmem:[%s0 + $0x40] sm:$0xff]
    %v38 = vld [vmem:[%s0 + $0x48] sm:$0xff]
    %v39 = vld [vmem:[%s0 + $0x50] sm:$0xff]
    %v40 = vld [vmem:[%s0 + $0x58] sm:$0xff]
    %v41 = vld [vmem:[%s0 + $0x60] sm:$0xff]
    %v42 = vld [vmem:[%s0 + $0x68] sm:$0xff]
    %v43 = vld [vmem:[%s0 + $0x70] sm:$0xff]
    %v44 = vld [vmem:[%s0 + $0x78] sm:$0xff]
    %v45 = vld [vmem:[%s0 + $0x80] sm:$0xff]
    %v46 = vld [vmem:[%s0 + $0x88] sm:$0xff]
    %v47 = vld [vmem:[%s0 + $0x90] sm:$0xff]
    %v48 = vld [vmem:[%s0 + $0x98] sm:$0xff]
    %v49 = vld [vmem:[%s0 + $0xa0] sm:$0xff]
    %v50 = vld [vmem:[%s0 + $0xa8] sm:$0xff]
    %v51 = vld [vmem:[%s0 + $0xb0] sm:$0xff]
    %v52 = vld [vmem:[%s0 + $0xb8] sm:$0xff]
    %v53 = vld [vmem:[%s0 + $0xc0] sm:$0xff]
    %v54 = vld [vmem:[%s0 + $0xc8] sm:$0xff]
    %v55 = vld [vmem:[%s0 + $0xd0] sm:$0xff]
    %v56 = vld [vmem:[%s0 + $0xd8] sm:$0xff]
    %v57 = vld [vmem:[%s0 + $0xe0] sm:$0xff]
    %v58 = vld [vmem:[%s0 + $0xe8] sm:$0xff]
    %v59 = vld [vmem:[%s0 + $0xf0] sm:$0xff]
    %v60 = vld [vmem:[%s0 + $0xf8] sm:$0xff]
    %vm61 = vcmask 261120
    %v62 = vsel %vm61, %v29, 0.0
    %v63 = vsel %vm61, %v30, 0.0
    %v64 = vadd.f32 %v62, %v63
    %v65 = vsel %vm61, %v31, 0.0
    %v66 = vadd.f32 %v64, %v65
    %v67 = vsel %vm61, %v32, 0.0
    %v68 = vadd.f32 %v66, %v67
    %v69 = vsel %vm61, %v33, 0.0
    %v70 = vadd.f32 %v68, %v69
    %v71 = vsel %vm61, %v34, 0.0
    %v72 = vadd.f32 %v70, %v71
    %v73 = vsel %vm61, %v35, 0.0
    %v74 = vadd.f32 %v72, %v73
    %v75 = vsel %vm61, %v36, 0.0
    %v76 = vadd.f32 %v74, %v75
    %v77 = vsel %vm61, %v37, 0.0
    %v78 = vadd.f32 %v76, %v77
    %v79 = vsel %vm61, %v38, 0.0
    %v80 = vadd.f32 %v78, %v79
    %v81 = vsel %vm61, %v39, 0.0
    %v82 = vadd.f32 %v80, %v81
    %v83 = vsel %vm61, %v40, 0.0
    %v84 = vadd.f32 %v82, %v83
    %v85 = vsel %vm61, %v41, 0.0
    %v86 = vadd.f32 %v84, %v85
    %v87 = vsel %vm61, %v42, 0.0
    %v88 = vadd.f32 %v86, %v87
    %v89 = vsel %vm61, %v43, 0.0
    %v90 = vadd.f32 %v88, %v89
    %v91 = vsel %vm61, %v44, 0.0
    %v92 = vadd.f32 %v90, %v91
    %v93 = vsel %vm61, %v45, 0.0
    %v94 = vadd.f32 %v92, %v93
    %v95 = vsel %vm61, %v46, 0.0
    %v96 = vadd.f32 %v94, %v95
    %v97 = vsel %vm61, %v47, 0.0
    %v98 = vadd.f32 %v96, %v97
    %v99 = vsel %vm61, %v48, 0.0
    %v100 = vadd.f32 %v98, %v99
    %v101 = vsel %vm61, %v49, 0.0
    %v102 = vadd.f32 %v100, %v101
    %v103 = vsel %vm61, %v50, 0.0
    %v104 = vadd.f32 %v102, %v103
    %v105 = vsel %vm61, %v51, 0.0
    %v106 = vadd.f32 %v104, %v105
    %v107 = vsel %vm61, %v52, 0.0
    %v108 = vadd.f32 %v106, %v107
    %v109 = vsel %vm61, %v53, 0.0
    %v110 = vadd.f32 %v108, %v109
    %v111 = vsel %vm61, %v54, 0.0
    %v112 = vadd.f32 %v110, %v111
    %v113 = vsel %vm61, %v55, 0.0
    %v114 = vadd.f32 %v112, %v113
    %v115 = vsel %vm61, %v56, 0.0
    %v116 = vadd.f32 %v114, %v115
    %v117 = vsel %vm61, %v57, 0.0
    %v118 = vadd.f32 %v116, %v117
    %v119 = vsel %vm61, %v58, 0.0
    %v120 = vadd.f32 %v118, %v119
    %v121 = vsel %vm61, %v59, 0.0
    %v122 = vadd.f32 %v120, %v121
    %v123 = vsel %vm61, %v60, 0.0
    %v124 = vadd.f32 %v122, %v123
    %v125 = vrot.slane %v124, 4
    %v126 = vadd.f32 %v124, %v125
    %v127 = vrot.slane %v126, 2
    %v128 = vadd.f32 %v126, %v127
    %v129 = vrot.slane %v128, 1
    %v130 = vadd.f32 %v128, %v129
    %v131 = vrcp.pop 256.0
    %v132 = vmul.f32 %v130, %v131
    %v133 = vsub.f32 %v29, %v132
    %v134 = vsub.f32 %v30, %v132
    %v135 = vsub.f32 %v31, %v132
    %v136 = vsub.f32 %v32, %v132
    %v137 = vsub.f32 %v33, %v132
    %v138 = vsub.f32 %v34, %v132
    %v139 = vsub.f32 %v35, %v132
    %v140 = vsub.f32 %v36, %v132
    %v141 = vsub.f32 %v37, %v132
    %v142 = vsub.f32 %v38, %v132
    %v143 = vsub.f32 %v39, %v132
    %v144 = vsub.f32 %v40, %v132
    %v145 = vsub.f32 %v41, %v132
    %v146 = vsub.f32 %v42, %v132
    %v147 = vsub.f32 %v43, %v132
    %v148 = vsub.f32 %v44, %v132
    %v149 = vsub.f32 %v45, %v132
    %v150 = vsub.f32 %v46, %v132
    %v151 = vsub.f32 %v47, %v132
    %v152 = vsub.f32 %v48, %v132
    %v153 = vsub.f32 %v49, %v132
    %v154 = vsub.f32 %v50, %v132
    %v155 = vsub.f32 %v51, %v132
    %v156 = vsub.f32 %v52, %v132
    %v157 = vsub.f32 %v53, %v132
    %v158 = vsub.f32 %v54, %v132
    %v159 = vsub.f32 %v55, %v132
    %v160 = vsub.f32 %v56, %v132
    %v161 = vsub.f32 %v57, %v132
    %v162 = vsub.f32 %v58, %v132
    %v163 = vsub.f32 %v59, %v132
    %v164 = vsub.f32 %v60, %v132
    %v165 = vmul.f32 %v133, %v133
    %v166 = vmul.f32 %v134, %v134
    %v167 = vmul.f32 %v135, %v135
    %v168 = vmul.f32 %v136, %v136
    %v169 = vmul.f32 %v137, %v137
    %v170 = vmul.f32 %v138, %v138
    %v171 = vmul.f32 %v139, %v139
    %v172 = vmul.f32 %v140, %v140
    %v173 = vmul.f32 %v141, %v141
    %v174 = vmul.f32 %v142, %v142
    %v175 = vmul.f32 %v143, %v143
    %v176 = vmul.f32 %v144, %v144
    %v177 = vmul.f32 %v145, %v145
    %v178 = vmul.f32 %v146, %v146
    %v179 = vmul.f32 %v147, %v147
    %v180 = vmul.f32 %v148, %v148
    %v181 = vmul.f32 %v149, %v149
    %v182 = vmul.f32 %v150, %v150
    %v183 = vmul.f32 %v151, %v151
    %v184 = vmul.f32 %v152, %v152
    %v185 = vmul.f32 %v153, %v153
    %v186 = vmul.f32 %v154, %v154
    %v187 = vmul.f32 %v155, %v155
    %v188 = vmul.f32 %v156, %v156
    %v189 = vmul.f32 %v157, %v157
    %v190 = vmul.f32 %v158, %v158
    %v191 = vmul.f32 %v159, %v159
    %v192 = vmul.f32 %v160, %v160
    %v193 = vmul.f32 %v161, %v161
    %v194 = vmul.f32 %v162, %v162
    %v195 = vmul.f32 %v163, %v163
    %v196 = vmul.f32 %v164, %v164
    %v197 = vsel %vm61, %v165, 0.0
    %v198 = vsel %vm61, %v166, 0.0
    %v199 = vadd.f32 %v197, %v198
    %v200 = vsel %vm61, %v167, 0.0
    %v201 = vadd.f32 %v199, %v200
    %v202 = vsel %vm61, %v168, 0.0
    %v203 = vadd.f32 %v201, %v202
    %v204 = vsel %vm61, %v169, 0.0
    %v205 = vadd.f32 %v203, %v204
    %v206 = vsel %vm61, %v170, 0.0
    %v207 = vadd.f32 %v205, %v206
    %v208 = vsel %vm61, %v171, 0.0
    %v209 = vadd.f32 %v207, %v208
    %v210 = vsel %vm61, %v172, 0.0
    %v211 = vadd.f32 %v209, %v210
    %v212 = vsel %vm61, %v173, 0.0
    %v213 = vadd.f32 %v211, %v212
    %v214 = vsel %vm61, %v174, 0.0
    %v215 = vadd.f32 %v213, %v214
    %v216 = vsel %vm61, %v175, 0.0
    %v217 = vadd.f32 %v215, %v216
    %v218 = vsel %vm61, %v176, 0.0
    %v219 = vadd.f32 %v217, %v218
    %v220 = vsel %vm61, %v177, 0.0
    %v221 = vadd.f32 %v219, %v220
    %v222 = vsel %vm61, %v178, 0.0
    %v223 = vadd.f32 %v221, %v222
    %v224 = vsel %vm61, %v179, 0.0
    %v225 = vadd.f32 %v223, %v224
    %v226 = vsel %vm61, %v180, 0.0
    %v227 = vadd.f32 %v225, %v226
    %v228 = vsel %vm61, %v181, 0.0
    %v229 = vadd.f32 %v227, %v228
    %v230 = vsel %vm61, %v182, 0.0
    %v231 = vadd.f32 %v229, %v230
    %v232 = vsel %vm61, %v183, 0.0
    %v233 = vadd.f32 %v231, %v232
    %v234 = vsel %vm61, %v184, 0.0
    %v235 = vadd.f32 %v233, %v234
    %v236 = vsel %vm61, %v185, 0.0
    %v237 = vadd.f32 %v235, %v236
    %v238 = vsel %vm61, %v186, 0.0
    %v239 = vadd.f32 %v237, %v238
    %v240 = vsel %vm61, %v187, 0.0
    %v241 = vadd.f32 %v239, %v240
    %v242 = vsel %vm61, %v188, 0.0
    %v243 = vadd.f32 %v241, %v242
    %v244 = vsel %vm61, %v189, 0.0
    %v245 = vadd.f32 %v243, %v244
    %v246 = vsel %vm61, %v190, 0.0
    %v247 = vadd.f32 %v245, %v246
    %v248 = vsel %vm61, %v191, 0.0
    %v249 = vadd.f32 %v247, %v248
    %v250 = vsel %vm61, %v192, 0.0
    %v251 = vadd.f32 %v249, %v250
    %v252 = vsel %vm61, %v193, 0.0
    %v253 = vadd.f32 %v251, %v252
    %v254 = vsel %vm61, %v194, 0.0
    %v255 = vadd.f32 %v253, %v254
    %v256 = vsel %vm61, %v195, 0.0
    %v257 = vadd.f32 %v255, %v256
    %v258 = vsel %vm61, %v196, 0.0
    %v259 = vadd.f32 %v257, %v258
    %v260 = vrot.slane %v259, 4
    %v261 = vadd.f32 %v259, %v260
    %v262 = vrot.slane %v261, 2
    %v263 = vadd.f32 %v261, %v262
    %v264 = vrot.slane %v263, 1
    %v265 = vadd.f32 %v263, %v264
    %v266 = vmul.f32 %v265, %v131
    %v267 = vadd.f32 %v266, 1e-05
    %v268 = vrsqrt.pop %v267
    %v269 = vmul.f32 %v133, %v268
    %v270 = vmul.f32 %v134, %v268
    %v271 = vmul.f32 %v135, %v268
    %v272 = vmul.f32 %v136, %v268
    %v273 = vmul.f32 %v137, %v268
    %v274 = vmul.f32 %v138, %v268
    %v275 = vmul.f32 %v139, %v268
    %v276 = vmul.f32 %v140, %v268
    %v277 = vmul.f32 %v141, %v268
    %v278 = vmul.f32 %v142, %v268
    %v279 = vmul.f32 %v143, %v268
    %v280 = vmul.f32 %v144, %v268
    %v281 = vmul.f32 %v145, %v268
    %v282 = vmul.f32 %v146, %v268
    %v283 = vmul.f32 %v147, %v268
    %v284 = vmul.f32 %v148, %v268
    %v285 = vmul.f32 %v149, %v268
    %v286 = vmul.f32 %v150, %v268
    %v287 = vmul.f32 %v151, %v268
    %v288 = vmul.f32 %v152, %v268
    %v289 = vmul.f32 %v153, %v268
    %v290 = vmul.f32 %v154, %v268
    %v291 = vmul.f32 %v155, %v268
    %v292 = vmul.f32 %v156, %v268
    %v293 = vmul.f32 %v157, %v268
    %v294 = vmul.f32 %v158, %v268
    %v295 = vmul.f32 %v159, %v268
    %v296 = vmul.f32 %v160, %v268
    %v297 = vmul.f32 %v161, %v268
    %v298 = vmul.f32 %v162, %v268
    %v299 = vmul.f32 %v163, %v268
    %v300 = vmul.f32 %v164, %v268
    %v301 = vld [vmem:[%s1] sm:$0x1]
    %v303 = vlaneseq
    %v304 = vshrl.u32 %v303, 7
    %v305 = vsub.s32 0, %v304
    %v306 = vrot.slane %v301, %v305
    %v308 = vmul.f32 %v269, %v306
    %v309 = vmul.f32 %v270, %v306
    %v310 = vmul.f32 %v271, %v306
    %v311 = vmul.f32 %v272, %v306
    %v312 = vmul.f32 %v273, %v306
    %v313 = vmul.f32 %v274, %v306
    %v314 = vmul.f32 %v275, %v306
    %v315 = vmul.f32 %v276, %v306
    %v316 = vmul.f32 %v277, %v306
    %v317 = vmul.f32 %v278, %v306
    %v318 = vmul.f32 %v279, %v306
    %v319 = vmul.f32 %v280, %v306
    %v320 = vmul.f32 %v281, %v306
    %v321 = vmul.f32 %v282, %v306
    %v322 = vmul.f32 %v283, %v306
    %v323 = vmul.f32 %v284, %v306
    %v324 = vmul.f32 %v285, %v306
    %v325 = vmul.f32 %v286, %v306
    %v326 = vmul.f32 %v287, %v306
    %v327 = vmul.f32 %v288, %v306
    %v328 = vmul.f32 %v289, %v306
    %v329 = vmul.f32 %v290, %v306
    %v330 = vmul.f32 %v291, %v306
    %v331 = vmul.f32 %v292, %v306
    %v332 = vmul.f32 %v293, %v306
    %v333 = vmul.f32 %v294, %v306
    %v334 = vmul.f32 %v295, %v306
    %v335 = vmul.f32 %v296, %v306
    %v336 = vmul.f32 %v297, %v306
    %v337 = vmul.f32 %v298, %v306
    %v338 = vmul.f32 %v299, %v306
    %v339 = vmul.f32 %v300, %v306
    %v340 = vld [vmem:[%s2] sm:$0x1]
    %v342 = vlaneseq
    %v343 = vshrl.u32 %v342, 7
    %v344 = vsub.s32 0, %v343
    %v345 = vrot.slane %v340, %v344
    %v347 = vadd.f32 %v308, %v345
    %v348 = vadd.f32 %v309, %v345
    %v349 = vadd.f32 %v310, %v345
    %v350 = vadd.f32 %v311, %v345
    %v351 = vadd.f32 %v312, %v345
    %v352 = vadd.f32 %v313, %v345
    %v353 = vadd.f32 %v314, %v345
    %v354 = vadd.f32 %v315, %v345
    %v355 = vadd.f32 %v316, %v345
    %v356 = vadd.f32 %v317, %v345
    %v357 = vadd.f32 %v318, %v345
    %v358 = vadd.f32 %v319, %v345
    %v359 = vadd.f32 %v320, %v345
    %v360 = vadd.f32 %v321, %v345
    %v361 = vadd.f32 %v322, %v345
    %v362 = vadd.f32 %v323, %v345
    %v363 = vadd.f32 %v324, %v345
    %v364 = vadd.f32 %v325, %v345
    %v365 = vadd.f32 %v326, %v345
    %v366 = vadd.f32 %v327, %v345
    %v367 = vadd.f32 %v328, %v345
    %v368 = vadd.f32 %v329, %v345
    %v369 = vadd.f32 %v330, %v345
    %v370 = vadd.f32 %v331, %v345
    %v371 = vadd.f32 %v332, %v345
    %v372 = vadd.f32 %v333, %v345
    %v373 = vadd.f32 %v334, %v345
    %v374 = vadd.f32 %v335, %v345
    %v375 = vadd.f32 %v336, %v345
    %v376 = vadd.f32 %v337, %v345
    %v377 = vadd.f32 %v338, %v345
    %v378 = vadd.f32 %v339, %v345
    %v379 = vld [vmem:[%s3] sm:$0xff]
    %v380 = vld [vmem:[%s3 + $0x8] sm:$0xff]
    %v381 = vld [vmem:[%s3 + $0x10] sm:$0xff]
    %v382 = vld [vmem:[%s3 + $0x18] sm:$0xff]
    %v383 = vld [vmem:[%s3 + $0x20] sm:$0xff]
    %v384 = vld [vmem:[%s3 + $0x28] sm:$0xff]
    %v385 = vld [vmem:[%s3 + $0x30] sm:$0xff]
    %v386 = vld [vmem:[%s3 + $0x38] sm:$0xff]
    %v387 = vld [vmem:[%s4] sm:$0x3]
    %v389 = vlaneseq
    %v390 = vshrl.u32 %v389, 7
    %v391 = vsub.s32 0, %v390
    %v392 = vrot.slane %v387, %v391
    %v393 = vlaneseq
    %v394 = vshrl.u32 %v393, 7
    %v395 = vsub.s32 1, %v394
    %v396 = vrot.slane %v387, %v395
    %v400 = vsel %vm61, %v347, 0
    %v403 = vsel %vm61, %v348, 0
    %v406 = vsel %vm61, %v349, 0
    %v409 = vsel %vm61, %v350, 0
    %v412 = vsel %vm61, %v351, 0
    %v415 = vsel %vm61, %v352, 0
    %v418 = vsel %vm61, %v353, 0
    %v421 = vsel %vm61, %v354, 0
    %v424 = vsel %vm61, %v355, 0
    %v427 = vsel %vm61, %v356, 0
    %v430 = vsel %vm61, %v357, 0
    %v433 = vsel %vm61, %v358, 0
    %v436 = vsel %vm61, %v359, 0
    %v439 = vsel %vm61, %v360, 0
    %v442 = vsel %vm61, %v361, 0
    %v445 = vsel %vm61, %v362, 0
    %v448 = vsel %vm61, %v363, 0
    %v451 = vsel %vm61, %v364, 0
    %v454 = vsel %vm61, %v365, 0
    %v457 = vsel %vm61, %v366, 0
    %v460 = vsel %vm61, %v367, 0
    %v463 = vsel %vm61, %v368, 0
    %v466 = vsel %vm61, %v369, 0
    %v469 = vsel %vm61, %v370, 0
    %v472 = vsel %vm61, %v371, 0
    %v475 = vsel %vm61, %v372, 0
    %v478 = vsel %vm61, %v373, 0
    %v481 = vsel %vm61, %v374, 0
    %v484 = vsel %vm61, %v375, 0
    %v487 = vsel %vm61, %v376, 0
    %v490 = vsel %vm61, %v377, 0
    %v493 = vsel %vm61, %v378, 0
    %495 = vmatprep.subr.mxu0 %v380
    %496 = vmatpush1.msra.mxu0 %v379
    %497 = vmatprep.subr.mxu0 %v382
    %498 = vmatpush1.msra.mxu0 %v381
    %499 = vmatprep.subr.mxu0 %v384
    %500 = vmatpush1.msra.mxu0 %v383
    %501 = vmatprep.subr.mxu0 %v386
    %502 = vmatpush1.msra.mxu0 %v385
    %503 = vmatprep.subr.mxu0 0.0
    %504 = vmatpush1.msra.mxu0 0.0
    %505 = vmatprep.subr.mxu0 0.0
    %506 = vmatpush1.msra.mxu0 0.0
    %507 = vmatprep.subr.mxu0 0.0
    %508 = vmatpush1.msra.mxu0 0.0
    %509 = vmatprep.subr.mxu0 0.0
    %510 = vmatpush1.msra.mxu0 0.0
    %511 = vmatprep.subr.mxu0 0.0
    %512 = vmatpush1.msra.mxu0 0.0
    %513 = vmatprep.subr.mxu0 0.0
    %514 = vmatpush1.msra.mxu0 0.0
    %515 = vmatprep.subr.mxu0 0.0
    %516 = vmatpush1.msra.mxu0 0.0
    %517 = vmatprep.subr.mxu0 0.0
    %518 = vmatpush1.msra.mxu0 0.0
    %519 = vmatprep.subr.mxu0 0.0
    %520 = vmatpush1.msra.mxu0 0.0
    %521 = vmatprep.subr.mxu0 0.0
    %522 = vmatpush1.msra.mxu0 0.0
    %523 = vmatprep.subr.mxu0 0.0
    %524 = vmatpush1.msra.mxu0 0.0
    %525 = vmatprep.subr.mxu0 0.0
    %526 = vmatpush1.msra.mxu0 0.0
    %527 = vmatprep.subr.mxu0 0.0
    %528 = vmatpush1.msra.mxu0 0.0
    %529 = vmatprep.subr.mxu0 0.0
    %530 = vmatpush1.msra.mxu0 0.0
    %531 = vmatprep.subr.mxu0 0.0
    %532 = vmatpush1.msra.mxu0 0.0
    %533 = vmatprep.subr.mxu0 0.0
    %534 = vmatpush1.msra.mxu0 0.0
    %535 = vmatprep.subr.mxu0 0.0
    %536 = vmatpush1.msra.mxu0 0.0
    %537 = vmatprep.subr.mxu0 0.0
    %538 = vmatpush1.msra.mxu0 0.0
    %539 = vmatprep.subr.mxu0 0.0
    %540 = vmatpush1.msra.mxu0 0.0
    %541 = vmatprep.subr.mxu0 0.0
    %542 = vmatpush1.msra.mxu0 0.0
    %543 = vmatprep.subr.mxu0 0.0
    %544 = vmatpush1.msra.mxu0 0.0
    %545 = vmatprep.subr.mxu0 0.0
    %546 = vmatpush1.msra.mxu0 0.0
    %547 = vmatprep.subr.mxu0 0.0
    %548 = vmatpush1.msra.mxu0 0.0
    %549 = vmatprep.subr.mxu0 0.0
    %550 = vmatpush1.msra.mxu0 0.0
    %551 = vmatprep.subr.mxu0 0.0
    %552 = vmatpush1.msra.mxu0 0.0
    %553 = vmatprep.subr.mxu0 0.0
    %554 = vmatpush1.msra.mxu0 0.0
    %555 = vmatprep.subr.mxu0 0.0
    %556 = vmatpush1.msra.mxu0 0.0
    %557 = vmatprep.subr.mxu0 0.0
    %558 = vmatpush1.msra.mxu0 0.0
    %559 = vmatprep.mubr.f32.mxu0 0.0
    %560 = vmatmul.mubr.f32.gmra.mrb[0].mxu0 %v400
    %v561 = vpop.f32.mrb[0].mxu0
    %v562 = vadd.f32 %v392, %v561
    %v563 = vpop.f32.mrb[0].mxu0
    %v564 = vadd.f32 %v396, %v563
    %565 = vmatprep.mubr.f32.mxu0 0.0
    %566 = vmatmul.mubr.f32.gmra.mrb[0].mxu0 %v403
    %v567 = vpop.f32.mrb[0].mxu0
    %v568 = vadd.f32 %v392, %v567
    %v569 = vpop.f32.mrb[0].mxu0
    %v570 = vadd.f32 %v396, %v569
    %571 = vmatprep.mubr.f32.mxu0 0.0
    %572 = vmatmul.mubr.f32.gmra.mrb[0].mxu0 %v406
    %v573 = vpop.f32.mrb[0].mxu0
    %v574 = vadd.f32 %v392, %v573
    %v575 = vpop.f32.mrb[0].mxu0
    %v576 = vadd.f32 %v396, %v575
    %577 = vmatprep.mubr.f32.mxu0 0.0
    %578 = vmatmul.mubr.f32.gmra.mrb[0].mxu0 %v409
    %v579 = vpop.f32.mrb[0].mxu0
    %v580 = vadd.f32 %v392, %v579
    %v581 = vpop.f32.mrb[0].mxu0
    %v582 = vadd.f32 %v396, %v581
    %583 = vmatprep.mubr.f32.mxu0 0.0
    %584 = vmatmul.mubr.f32.gmra.mrb[0].mxu0 %v412
    %v585 = vpop.f32.mrb[0].mxu0
    %v586 = vadd.f32 %v392, %v585
    %v587 = vpop.f32.mrb[0].mxu0
    %v588 = vadd.f32 %v396, %v587
    %589 = vmatprep.mubr.f32.mxu0 0.0
    %590 = vmatmul.mubr.f32.gmra.mrb[0].mxu0 %v415
    %v591 = vpop.f32.mrb[0].mxu0
    %v592 = vadd.f32 %v392, %v591
    %v593 = vpop.f32.mrb[0].mxu0
    %v594 = vadd.f32 %v396, %v593
    %595 = vmatprep.mubr.f32.mxu0 0.0
    %596 = vmatmul.mubr.f32.gmra.mrb[0].mxu0 %v418
    %v597 = vpop.f32.mrb[0].mxu0
    %v598 = vadd.f32 %v392, %v597
    %v599 = vpop.f32.mrb[0].mxu0
    %v600 = vadd.f32 %v396, %v599
    %601 = vmatprep.mubr.f32.mxu0 0.0
    %602 = vmatmul.mubr.f32.gmra.mrb[0].mxu0 %v421
    %v603 = vpop.f32.mrb[0].mxu0
    %v604 = vadd.f32 %v392, %v603
    %v605 = vpop.f32.mrb[0].mxu0
    %v606 = vadd.f32 %v396, %v605
    %607 = vmatprep.mubr.f32.mxu0 0.0
    %608 = vmatmul.mubr.f32.gmra.mrb[0].mxu0 %v424
    %v609 = vpop.f32.mrb[0].mxu0
    %v610 = vadd.f32 %v392, %v609
    %v611 = vpop.f32.mrb[0].mxu0
    %v612 = vadd.f32 %v396, %v611
    %613 = vmatprep.mubr.f32.mxu0 0.0
    %614 = vmatmul.mubr.f32.gmra.mrb[0].mxu0 %v427
    %v615 = vpop.f32.mrb[0].mxu0
    %v616 = vadd.f32 %v392, %v615
    %v617 = vpop.f32.mrb[0].mxu0
    %v618 = vadd.f32 %v396, %v617
    %619 = vmatprep.mubr.f32.mxu0 0.0
    %620 = vmatmul.mubr.f32.gmra.mrb[0].mxu0 %v430
    %v621 = vpop.f32.mrb[0].mxu0
    %v622 = vadd.f32 %v392, %v621
    %v623 = vpop.f32.mrb[0].mxu0
    %v624 = vadd.f32 %v396, %v623
    %625 = vmatprep.mubr.f32.mxu0 0.0
    %626 = vmatmul.mubr.f32.gmra.mrb[0].mxu0 %v433
    %v627 = vpop.f32.mrb[0].mxu0
    %v628 = vadd.f32 %v392, %v627
    %v629 = vpop.f32.mrb[0].mxu0
    %v630 = vadd.f32 %v396, %v629
    %631 = vmatprep.mubr.f32.mxu0 0.0
    %632 = vmatmul.mubr.f32.gmra.mrb[0].mxu0 %v436
    %v633 = vpop.f32.mrb[0].mxu0
    %v634 = vadd.f32 %v392, %v633
    %v635 = vpop.f32.mrb[0].mxu0
    %v636 = vadd.f32 %v396, %v635
    %637 = vmatprep.mubr.f32.mxu0 0.0
    %638 = vmatmul.mubr.f32.gmra.mrb[0].mxu0 %v439
    %v639 = vpop.f32.mrb[0].mxu0
    %v640 = vadd.f32 %v392, %v639
    %v641 = vpop.f32.mrb[0].mxu0
    %v642 = vadd.f32 %v396, %v641
    %643 = vmatprep.mubr.f32.mxu0 0.0
    %644 = vmatmul.mubr.f32.gmra.mrb[0].mxu0 %v442
    %v645 = vpop.f32.mrb[0].mxu0
    %v646 = vadd.f32 %v392, %v645
    %v647 = vpop.f32.mrb[0].mxu0
    %v648 = vadd.f32 %v396, %v647
    %649 = vmatprep.mubr.f32.mxu0 0.0
    %650 = vmatmul.mubr.f32.gmra.mrb[0].mxu0 %v445
    %v651 = vpop.f32.mrb[0].mxu0
    %v652 = vadd.f32 %v392, %v651
    %v653 = vpop.f32.mrb[0].mxu0
    %v654 = vadd.f32 %v396, %v653
    %655 = vmatprep.mubr.f32.mxu0 0.0
    %656 = vmatmul.mubr.f32.gmra.mrb[0].mxu0 %v448
    %v657 = vpop.f32.mrb[0].mxu0
    %v658 = vadd.f32 %v392, %v657
    %v659 = vpop.f32.mrb[0].mxu0
    %v660 = vadd.f32 %v396, %v659
    %661 = vmatprep.mubr.f32.mxu0 0.0
    %662 = vmatmul.mubr.f32.gmra.mrb[0].mxu0 %v451
    %v663 = vpop.f32.mrb[0].mxu0
    %v664 = vadd.f32 %v392, %v663
    %v665 = vpop.f32.mrb[0].mxu0
    %v666 = vadd.f32 %v396, %v665
    %667 = vmatprep.mubr.f32.mxu0 0.0
    %668 = vmatmul.mubr.f32.gmra.mrb[0].mxu0 %v454
    %v669 = vpop.f32.mrb[0].mxu0
    %v670 = vadd.f32 %v392, %v669
    %v671 = vpop.f32.mrb[0].mxu0
    %v672 = vadd.f32 %v396, %v671
    %673 = vmatprep.mubr.f32.mxu0 0.0
    %674 = vmatmul.mubr.f32.gmra.mrb[0].mxu0 %v457
    %v675 = vpop.f32.mrb[0].mxu0
    %v676 = vadd.f32 %v392, %v675
    %v677 = vpop.f32.mrb[0].mxu0
    %v678 = vadd.f32 %v396, %v677
    %679 = vmatprep.mubr.f32.mxu0 0.0
    %680 = vmatmul.mubr.f32.gmra.mrb[0].mxu0 %v460
    %v681 = vpop.f32.mrb[0].mxu0
    %v682 = vadd.f32 %v392, %v681
    %v683 = vpop.f32.mrb[0].mxu0
    %v684 = vadd.f32 %v396, %v683
    %685 = vmatprep.mubr.f32.mxu0 0.0
    %686 = vmatmul.mubr.f32.gmra.mrb[0].mxu0 %v463
    %v687 = vpop.f32.mrb[0].mxu0
    %v688 = vadd.f32 %v392, %v687
    %v689 = vpop.f32.mrb[0].mxu0
    %v690 = vadd.f32 %v396, %v689
    %691 = vmatprep.mubr.f32.mxu0 0.0
    %692 = vmatmul.mubr.f32.gmra.mrb[0].mxu0 %v466
    %v693 = vpop.f32.mrb[0].mxu0
    %v694 = vadd.f32 %v392, %v693
    %v695 = vpop.f32.mrb[0].mxu0
    %v696 = vadd.f32 %v396, %v695
    %697 = vmatprep.mubr.f32.mxu0 0.0
    %698 = vmatmul.mubr.f32.gmra.mrb[0].mxu0 %v469
    %v699 = vpop.f32.mrb[0].mxu0
    %v700 = vadd.f32 %v392, %v699
    %v701 = vpop.f32.mrb[0].mxu0
    %v702 = vadd.f32 %v396, %v701
    %703 = vmatprep.mubr.f32.mxu0 0.0
    %704 = vmatmul.mubr.f32.gmra.mrb[0].mxu0 %v472
    %v705 = vpop.f32.mrb[0].mxu0
    %v706 = vadd.f32 %v392, %v705
    %v707 = vpop.f32.mrb[0].mxu0
    %v708 = vadd.f32 %v396, %v707
    %709 = vmatprep.mubr.f32.mxu0 0.0
    %710 = vmatmul.mubr.f32.gmra.mrb[0].mxu0 %v475
    %v711 = vpop.f32.mrb[0].mxu0
    %v712 = vadd.f32 %v392, %v711
    %v713 = vpop.f32.mrb[0].mxu0
    %v714 = vadd.f32 %v396, %v713
    %715 = vmatprep.mubr.f32.mxu0 0.0
    %716 = vmatmul.mubr.f32.gmra.mrb[0].mxu0 %v478
    %v717 = vpop.f32.mrb[0].mxu0
    %v718 = vadd.f32 %v392, %v717
    %v719 = vpop.f32.mrb[0].mxu0
    %v720 = vadd.f32 %v396, %v719
    %721 = vmatprep.mubr.f32.mxu0 0.0
    %722 = vmatmul.mubr.f32.gmra.mrb[0].mxu0 %v481
    %v723 = vpop.f32.mrb[0].mxu0
    %v724 = vadd.f32 %v392, %v723
    %v725 = vpop.f32.mrb[0].mxu0
    %v726 = vadd.f32 %v396, %v725
    %727 = vmatprep.mubr.f32.mxu0 0.0
    %728 = vmatmul.mubr.f32.gmra.mrb[0].mxu0 %v484
    %v729 = vpop.f32.mrb[0].mxu0
    %v730 = vadd.f32 %v392, %v729
    %v731 = vpop.f32.mrb[0].mxu0
    %v732 = vadd.f32 %v396, %v731
    %733 = vmatprep.mubr.f32.mxu0 0.0
    %734 = vmatmul.mubr.f32.gmra.mrb[0].mxu0 %v487
    %v735 = vpop.f32.mrb[0].mxu0
    %v736 = vadd.f32 %v392, %v735
    %v737 = vpop.f32.mrb[0].mxu0
    %v738 = vadd.f32 %v396, %v737
    %739 = vmatprep.mubr.f32.mxu0 0.0
    %740 = vmatmul.mubr.f32.gmra.mrb[0].mxu0 %v490
    %v741 = vpop.f32.mrb[0].mxu0
    %v742 = vadd.f32 %v392, %v741
    %v743 = vpop.f32.mrb[0].mxu0
    %v744 = vadd.f32 %v396, %v743
    %745 = vmatprep.mubr.f32.mxu0 0.0
    %746 = vmatmul.mubr.f32.gmra.mrb[0].mxu0 %v493
    %v747 = vpop.f32.mrb[0].mxu0
    %v748 = vadd.f32 %v392, %v747
    %v749 = vpop.f32.mrb[0].mxu0
    %v750 = vadd.f32 %v396, %v749
    %751 = vdwg.mxu0
    %v752 = vpack.c.bf16 %v568, %v562
    %v753 = vpack.c.bf16 %v570, %v564
    %v754 = vpack.c.bf16 %v580, %v574
    %v755 = vpack.c.bf16 %v582, %v576
    %v756 = vpack.c.bf16 %v592, %v586
    %v757 = vpack.c.bf16 %v594, %v588
    %v758 = vpack.c.bf16 %v604, %v598
    %v759 = vpack.c.bf16 %v606, %v600
    %v760 = vpack.c.bf16 %v616, %v610
    %v761 = vpack.c.bf16 %v618, %v612
    %v762 = vpack.c.bf16 %v628, %v622
    %v763 = vpack.c.bf16 %v630, %v624
    %v764 = vpack.c.bf16 %v640, %v634
    %v765 = vpack.c.bf16 %v642, %v636
    %v766 = vpack.c.bf16 %v652, %v646
    %v767 = vpack.c.bf16 %v654, %v648
    %v768 = vpack.c.bf16 %v664, %v658
    %v769 = vpack.c.bf16 %v666, %v660
    %v770 = vpack.c.bf16 %v676, %v670
    %v771 = vpack.c.bf16 %v678, %v672
    %v772 = vpack.c.bf16 %v688, %v682
    %v773 = vpack.c.bf16 %v690, %v684
    %v774 = vpack.c.bf16 %v700, %v694
    %v775 = vpack.c.bf16 %v702, %v696
    %v776 = vpack.c.bf16 %v712, %v706
    %v777 = vpack.c.bf16 %v714, %v708
    %v778 = vpack.c.bf16 %v724, %v718
    %v779 = vpack.c.bf16 %v726, %v720
    %v780 = vpack.c.bf16 %v736, %v730
    %v781 = vpack.c.bf16 %v738, %v732
    %v782 = vpack.c.bf16 %v748, %v742
    %v783 = vpack.c.bf16 %v750, %v744
    %v816 = vunpack.c.l.b16 %v752
    %v817 = vunpack.c.l.b16 %v753
    %v818 = vunpack.c.h.b16 %v752
    %v819 = vunpack.c.h.b16 %v753
    %v820 = vunpack.c.l.b16 %v754
    %v821 = vunpack.c.l.b16 %v755
    %v822 = vunpack.c.h.b16 %v754
    %v823 = vunpack.c.h.b16 %v755
    %v824 = vunpack.c.l.b16 %v756
    %v825 = vunpack.c.l.b16 %v757
    %v826 = vunpack.c.h.b16 %v756
    %v827 = vunpack.c.h.b16 %v757
    %v828 = vunpack.c.l.b16 %v758
    %v829 = vunpack.c.l.b16 %v759
    %v830 = vunpack.c.h.b16 %v758
    %v831 = vunpack.c.h.b16 %v759
    %v832 = vunpack.c.l.b16 %v760
    %v833 = vunpack.c.l.b16 %v761
    %v834 = vunpack.c.h.b16 %v760
    %v835 = vunpack.c.h.b16 %v761
    %v836 = vunpack.c.l.b16 %v762
    %v837 = vunpack.c.l.b16 %v763
    %v838 = vunpack.c.h.b16 %v762
    %v839 = vunpack.c.h.b16 %v763
    %v840 = vunpack.c.l.b16 %v764
    %v841 = vunpack.c.l.b16 %v765
    %v842 = vunpack.c.h.b16 %v764
    %v843 = vunpack.c.h.b16 %v765
    %v844 = vunpack.c.l.b16 %v766
    %v845 = vunpack.c.l.b16 %v767
    %v846 = vunpack.c.h.b16 %v766
    %v847 = vunpack.c.h.b16 %v767
    %v848 = vunpack.c.l.b16 %v768
    %v849 = vunpack.c.l.b16 %v769
    %v850 = vunpack.c.h.b16 %v768
    %v851 = vunpack.c.h.b16 %v769
    %v852 = vunpack.c.l.b16 %v770
    %v853 = vunpack.c.l.b16 %v771
    %v854 = vunpack.c.h.b16 %v770
    %v855 = vunpack.c.h.b16 %v771
    %v856 = vunpack.c.l.b16 %v772
    %v857 = vunpack.c.l.b16 %v773
    %v858 = vunpack.c.h.b16 %v772
    %v859 = vunpack.c.h.b16 %v773
    %v860 = vunpack.c.l.b16 %v774
    %v861 = vunpack.c.l.b16 %v775
    %v862 = vunpack.c.h.b16 %v774
    %v863 = vunpack.c.h.b16 %v775
    %v864 = vunpack.c.l.b16 %v776
    %v865 = vunpack.c.l.b16 %v777
    %v866 = vunpack.c.h.b16 %v776
    %v867 = vunpack.c.h.b16 %v777
    %v868 = vunpack.c.l.b16 %v778
    %v869 = vunpack.c.l.b16 %v779
    %v870 = vunpack.c.h.b16 %v778
    %v871 = vunpack.c.h.b16 %v779
    %v872 = vunpack.c.l.b16 %v780
    %v873 = vunpack.c.l.b16 %v781
    %v874 = vunpack.c.h.b16 %v780
    %v875 = vunpack.c.h.b16 %v781
    %v876 = vunpack.c.l.b16 %v782
    %v877 = vunpack.c.l.b16 %v783
    %v878 = vunpack.c.h.b16 %v782
    %v879 = vunpack.c.h.b16 %v783
    %v880 = vpack.c.b16 %v817, %v816
    %v881 = vpack.c.b16 %v819, %v818
    %v882 = vpack.c.b16 %v821, %v820
    %v883 = vpack.c.b16 %v823, %v822
    %v884 = vpack.c.b16 %v825, %v824
    %v885 = vpack.c.b16 %v827, %v826
    %v886 = vpack.c.b16 %v829, %v828
    %v887 = vpack.c.b16 %v831, %v830
    %v888 = vpack.c.b16 %v833, %v832
    %v889 = vpack.c.b16 %v835, %v834
    %v890 = vpack.c.b16 %v837, %v836
    %v891 = vpack.c.b16 %v839, %v838
    %v892 = vpack.c.b16 %v841, %v840
    %v893 = vpack.c.b16 %v843, %v842
    %v894 = vpack.c.b16 %v845, %v844
    %v895 = vpack.c.b16 %v847, %v846
    %v896 = vpack.c.b16 %v849, %v848
    %v897 = vpack.c.b16 %v851, %v850
    %v898 = vpack.c.b16 %v853, %v852
    %v899 = vpack.c.b16 %v855, %v854
    %v900 = vpack.c.b16 %v857, %v856
    %v901 = vpack.c.b16 %v859, %v858
    %v902 = vpack.c.b16 %v861, %v860
    %v903 = vpack.c.b16 %v863, %v862
    %v904 = vpack.c.b16 %v865, %v864
    %v905 = vpack.c.b16 %v867, %v866
    %v906 = vpack.c.b16 %v869, %v868
    %v907 = vpack.c.b16 %v871, %v870
    %v908 = vpack.c.b16 %v873, %v872
    %v909 = vpack.c.b16 %v875, %v874
    %v910 = vpack.c.b16 %v877, %v876
    %v911 = vpack.c.b16 %v879, %v878
    %944 = vst [vmem:[#allocation2] sm:$0xff] %v880
    %945 = vst [vmem:[#allocation2 + $0x8] sm:$0xff] %v881
    %946 = vst [vmem:[#allocation2 + $0x10] sm:$0xff] %v882
    %947 = vst [vmem:[#allocation2 + $0x18] sm:$0xff] %v883
    %948 = vst [vmem:[#allocation2 + $0x20] sm:$0xff] %v884
    %949 = vst [vmem:[#allocation2 + $0x28] sm:$0xff] %v885
    %950 = vst [vmem:[#allocation2 + $0x30] sm:$0xff] %v886
    %951 = vst [vmem:[#allocation2 + $0x38] sm:$0xff] %v887
    %952 = vst [vmem:[#allocation2 + $0x40] sm:$0xff] %v888
    %953 = vst [vmem:[#allocation2 + $0x48] sm:$0xff] %v889
    %954 = vst [vmem:[#allocation2 + $0x50] sm:$0xff] %v890
    %955 = vst [vmem:[#allocation2 + $0x58] sm:$0xff] %v891
    %956 = vst [vmem:[#allocation2 + $0x60] sm:$0xff] %v892
    %957 = vst [vmem:[#allocation2 + $0x68] sm:$0xff] %v893
    %958 = vst [vmem:[#allocation2 + $0x70] sm:$0xff] %v894
    %959 = vst [vmem:[#allocation2 + $0x78] sm:$0xff] %v895
    %960 = vst [vmem:[#allocation2 + $0x80] sm:$0xff] %v896
    %961 = vst [vmem:[#allocation2 + $0x88] sm:$0xff] %v897
    %962 = vst [vmem:[#allocation2 + $0x90] sm:$0xff] %v898
    %963 = vst [vmem:[#allocation2 + $0x98] sm:$0xff] %v899
    %964 = vst [vmem:[#allocation2 + $0xa0] sm:$0xff] %v900
    %965 = vst [vmem:[#allocation2 + $0xa8] sm:$0xff] %v901
    %966 = vst [vmem:[#allocation2 + $0xb0] sm:$0xff] %v902
    %967 = vst [vmem:[#allocation2 + $0xb8] sm:$0xff] %v903
    %968 = vst [vmem:[#allocation2 + $0xc0] sm:$0xff] %v904
    %969 = vst [vmem:[#allocation2 + $0xc8] sm:$0xff] %v905
    %970 = vst [vmem:[#allocation2 + $0xd0] sm:$0xff] %v906
    %971 = vst [vmem:[#allocation2 + $0xd8] sm:$0xff] %v907
    %972 = vst [vmem:[#allocation2 + $0xe0] sm:$0xff] %v908
    %973 = vst [vmem:[#allocation2 + $0xe8] sm:$0xff] %v909
    %974 = vst [vmem:[#allocation2 + $0xf0] sm:$0xff] %v910
    %975 = vst [vmem:[#allocation2 + $0xf8] sm:$0xff] %v911
    %v976 = vld [vmem:[%s5] sm:$0xff]
    %v977 = vld [vmem:[%s5 + $0x8] sm:$0xff]
    %v978 = vld [vmem:[%s5 + $0x10] sm:$0xff]
    %v979 = vld [vmem:[%s5 + $0x18] sm:$0xff]
    %v980 = vld [vmem:[%s6] sm:$0x1]
    %v982 = vlaneseq
    %v983 = vshrl.u32 %v982, 7
    %v984 = vsub.s32 0, %v983
    %v985 = vrot.slane %v980, %v984
    %987 = vmatprep.subr.mxu0 0.0
    %988 = vmatpush1.msra.mxu0 %v976
    %989 = vmatprep.subr.mxu0 0.0
    %990 = vmatpush1.msra.mxu0 %v977
    %991 = vmatprep.subr.mxu0 0.0
    %992 = vmatpush1.msra.mxu0 %v978
    %993 = vmatprep.subr.mxu0 0.0
    %994 = vmatpush1.msra.mxu0 %v979
    %995 = vmatprep.subr.mxu0 0.0
    %996 = vmatpush1.msra.mxu0 0.0
    %997 = vmatprep.subr.mxu0 0.0
    %998 = vmatpush1.msra.mxu0 0.0
    %999 = vmatprep.subr.mxu0 0.0
    %1000 = vmatpush1.msra.mxu0 0.0
    %1001 = vmatprep.subr.mxu0 0.0
    %1002 = vmatpush1.msra.mxu0 0.0
    %1003 = vmatprep.subr.mxu0 0.0
    %1004 = vmatpush1.msra.mxu0 0.0
    %1005 = vmatprep.subr.mxu0 0.0
    %1006 = vmatpush1.msra.mxu0 0.0
    %1007 = vmatprep.subr.mxu0 0.0
    %1008 = vmatpush1.msra.mxu0 0.0
    %1009 = vmatprep.subr.mxu0 0.0
    %1010 = vmatpush1.msra.mxu0 0.0
    %1011 = vmatprep.subr.mxu0 0.0
    %1012 = vmatpush1.msra.mxu0 0.0
    %1013 = vmatprep.subr.mxu0 0.0
    %1014 = vmatpush1.msra.mxu0 0.0
    %1015 = vmatprep.subr.mxu0 0.0
    %1016 = vmatpush1.msra.mxu0 0.0
    %1017 = vmatprep.subr.mxu0 0.0
    %1018 = vmatpush1.msra.mxu0 0.0
    %1019 = vmatprep.subr.mxu0 0.0
    %1020 = vmatpush1.msra.mxu0 0.0
    %1021 = vmatprep.subr.mxu0 0.0
    %1022 = vmatpush1.msra.mxu0 0.0
    %1023 = vmatprep.subr.mxu0 0.0
    %1024 = vmatpush1.msra.mxu0 0.0
    %1025 = vmatprep.subr.mxu0 0.0
    %1026 = vmatpush1.msra.mxu0 0.0
    %1027 = vmatprep.subr.mxu0 0.0
    %1028 = vmatpush1.msra.mxu0 0.0
    %1029 = vmatprep.subr.mxu0 0.0
    %1030 = vmatpush1.msra.mxu0 0.0
    %1031 = vmatprep.subr.mxu0 0.0
    %1032 = vmatpush1.msra.mxu0 0.0
    %1033 = vmatprep.subr.mxu0 0.0
    %1034 = vmatpush1.msra.mxu0 0.0
    %1035 = vmatprep.subr.mxu0 0.0
    %1036 = vmatpush1.msra.mxu0 0.0
    %1037 = vmatprep.subr.mxu0 0.0
    %1038 = vmatpush1.msra.mxu0 0.0
    %1039 = vmatprep.subr.mxu0 0.0
    %1040 = vmatpush1.msra.mxu0 0.0
    %1041 = vmatprep.subr.mxu0 0.0
    %1042 = vmatpush1.msra.mxu0 0.0
    %1043 = vmatprep.subr.mxu0 0.0
    %1044 = vmatpush1.msra.mxu0 0.0
    %1045 = vmatprep.subr.mxu0 0.0
    %1046 = vmatpush1.msra.mxu0 0.0
    %1047 = vmatprep.subr.mxu0 0.0
    %1048 = vmatpush1.msra.mxu0 0.0
    %1049 = vmatprep.subr.mxu0 0.0
    %1050 = vmatpush1.msra.mxu0 0.0
    %1051 = vmatprep.mubr.f32.mxu0 0.0
    %1052 = vmatmul.mubr.f32.gmra.mrb[0].mxu0 %v400
    %v1053 = vpop.f32.mrb[0].mxu0
    %v1054 = vadd.f32 %v985, %v1053
    %v1055 = vpop.f32.mrb[0].mxu0
    %1056 = vmatprep.mubr.f32.mxu0 0.0
    %1057 = vmatmul.mubr.f32.gmra.mrb[0].mxu0 %v403
    %v1058 = vpop.f32.mrb[0].mxu0
    %v1059 = vadd.f32 %v985, %v1058
    %v1060 = vpop.f32.mrb[0].mxu0
    %1061 = vmatprep.mubr.f32.mxu0 0.0
    %1062 = vmatmul.mubr.f32.gmra.mrb[0].mxu0 %v406
    %v1063 = vpop.f32.mrb[0].mxu0
    %v1064 = vadd.f32 %v985, %v1063
    %v1065 = vpop.f32.mrb[0].mxu0
    %1066 = vmatprep.mubr.f32.mxu0 0.0
    %1067 = vmatmul.mubr.f32.gmra.mrb[0].mxu0 %v409
    %v1068 = vpop.f32.mrb[0].mxu0
    %v1069 = vadd.f32 %v985, %v1068
    %v1070 = vpop.f32.mrb[0].mxu0
    %1071 = vmatprep.mubr.f32.mxu0 0.0
    %1072 = vmatmul.mubr.f32.gmra.mrb[0].mxu0 %v412
    %v1073 = vpop.f32.mrb[0].mxu0
    %v1074 = vadd.f32 %v985, %v1073
    %v1075 = vpop.f32.mrb[0].mxu0
    %1076 = vmatprep.mubr.f32.mxu0 0.0
    %1077 = vmatmul.mubr.f32.gmra.mrb[0].mxu0 %v415
    %v1078 = vpop.f32.mrb[0].mxu0
    %v1079 = vadd.f32 %v985, %v1078
    %v1080 = vpop.f32.mrb[0].mxu0
    %1081 = vmatprep.mubr.f32.mxu0 0.0
    %1082 = vmatmul.mubr.f32.gmra.mrb[0].mxu0 %v418
    %v1083 = vpop.f32.mrb[0].mxu0
    %v1084 = vadd.f32 %v985, %v1083
    %v1085 = vpop.f32.mrb[0].mxu0
    %1086 = vmatprep.mubr.f32.mxu0 0.0
    %1087 = vmatmul.mubr.f32.gmra.mrb[0].mxu0 %v421
    %v1088 = vpop.f32.mrb[0].mxu0
    %v1089 = vadd.f32 %v985, %v1088
    %v1090 = vpop.f32.mrb[0].mxu0
    %1091 = vmatprep.mubr.f32.mxu0 0.0
    %1092 = vmatmul.mubr.f32.gmra.mrb[0].mxu0 %v424
    %v1093 = vpop.f32.mrb[0].mxu0
    %v1094 = vadd.f32 %v985, %v1093
    %v1095 = vpop.f32.mrb[0].mxu0
    %1096 = vmatprep.mubr.f32.mxu0 0.0
    %1097 = vmatmul.mubr.f32.gmra.mrb[0].mxu0 %v427
    %v1098 = vpop.f32.mrb[0].mxu0
    %v1099 = vadd.f32 %v985, %v1098
    %v1100 = vpop.f32.mrb[0].mxu0
    %1101 = vmatprep.mubr.f32.mxu0 0.0
    %1102 = vmatmul.mubr.f32.gmra.mrb[0].mxu0 %v430
    %v1103 = vpop.f32.mrb[0].mxu0
    %v1104 = vadd.f32 %v985, %v1103
    %v1105 = vpop.f32.mrb[0].mxu0
    %1106 = vmatprep.mubr.f32.mxu0 0.0
    %1107 = vmatmul.mubr.f32.gmra.mrb[0].mxu0 %v433
    %v1108 = vpop.f32.mrb[0].mxu0
    %v1109 = vadd.f32 %v985, %v1108
    %v1110 = vpop.f32.mrb[0].mxu0
    %1111 = vmatprep.mubr.f32.mxu0 0.0
    %1112 = vmatmul.mubr.f32.gmra.mrb[0].mxu0 %v436
    %v1113 = vpop.f32.mrb[0].mxu0
    %v1114 = vadd.f32 %v985, %v1113
    %v1115 = vpop.f32.mrb[0].mxu0
    %1116 = vmatprep.mubr.f32.mxu0 0.0
    %1117 = vmatmul.mubr.f32.gmra.mrb[0].mxu0 %v439
    %v1118 = vpop.f32.mrb[0].mxu0
    %v1119 = vadd.f32 %v985, %v1118
    %v1120 = vpop.f32.mrb[0].mxu0
    %1121 = vmatprep.mubr.f32.mxu0 0.0
    %1122 = vmatmul.mubr.f32.gmra.mrb[0].mxu0 %v442
    %v1123 = vpop.f32.mrb[0].mxu0
    %v1124 = vadd.f32 %v985, %v1123
    %v1125 = vpop.f32.mrb[0].mxu0
    %1126 = vmatprep.mubr.f32.mxu0 0.0
    %1127 = vmatmul.mubr.f32.gmra.mrb[0].mxu0 %v445
    %v1128 = vpop.f32.mrb[0].mxu0
    %v1129 = vadd.f32 %v985, %v1128
    %v1130 = vpop.f32.mrb[0].mxu0
    %1131 = vmatprep.mubr.f32.mxu0 0.0
    %1132 = vmatmul.mubr.f32.gmra.mrb[0].mxu0 %v448
    %v1133 = vpop.f32.mrb[0].mxu0
    %v1134 = vadd.f32 %v985, %v1133
    %v1135 = vpop.f32.mrb[0].mxu0
    %1136 = vmatprep.mubr.f32.mxu0 0.0
    %1137 = vmatmul.mubr.f32.gmra.mrb[0].mxu0 %v451
    %v1138 = vpop.f32.mrb[0].mxu0
    %v1139 = vadd.f32 %v985, %v1138
    %v1140 = vpop.f32.mrb[0].mxu0
    %1141 = vmatprep.mubr.f32.mxu0 0.0
    %1142 = vmatmul.mubr.f32.gmra.mrb[0].mxu0 %v454
    %v1143 = vpop.f32.mrb[0].mxu0
    %v1144 = vadd.f32 %v985, %v1143
    %v1145 = vpop.f32.mrb[0].mxu0
    %1146 = vmatprep.mubr.f32.mxu0 0.0
    %1147 = vmatmul.mubr.f32.gmra.mrb[0].mxu0 %v457
    %v1148 = vpop.f32.mrb[0].mxu0
    %v1149 = vadd.f32 %v985, %v1148
    %v1150 = vpop.f32.mrb[0].mxu0
    %1151 = vmatprep.mubr.f32.mxu0 0.0
    %1152 = vmatmul.mubr.f32.gmra.mrb[0].mxu0 %v460
    %v1153 = vpop.f32.mrb[0].mxu0
    %v1154 = vadd.f32 %v985, %v1153
    %v1155 = vpop.f32.mrb[0].mxu0
    %1156 = vmatprep.mubr.f32.mxu0 0.0
    %1157 = vmatmul.mubr.f32.gmra.mrb[0].mxu0 %v463
    %v1158 = vpop.f32.mrb[0].mxu0
    %v1159 = vadd.f32 %v985, %v1158
    %v1160 = vpop.f32.mrb[0].mxu0
    %1161 = vmatprep.mubr.f32.mxu0 0.0
    %1162 = vmatmul.mubr.f32.gmra.mrb[0].mxu0 %v466
    %v1163 = vpop.f32.mrb[0].mxu0
    %v1164 = vadd.f32 %v985, %v1163
    %v1165 = vpop.f32.mrb[0].mxu0
    %1166 = vmatprep.mubr.f32.mxu0 0.0
    %1167 = vmatmul.mubr.f32.gmra.mrb[0].mxu0 %v469
    %v1168 = vpop.f32.mrb[0].mxu0
    %v1169 = vadd.f32 %v985, %v1168
    %v1170 = vpop.f32.mrb[0].mxu0
    %1171 = vmatprep.mubr.f32.mxu0 0.0
    %1172 = vmatmul.mubr.f32.gmra.mrb[0].mxu0 %v472
    %v1173 = vpop.f32.mrb[0].mxu0
    %v1174 = vadd.f32 %v985, %v1173
    %v1175 = vpop.f32.mrb[0].mxu0
    %1176 = vmatprep.mubr.f32.mxu0 0.0
    %1177 = vmatmul.mubr.f32.gmra.mrb[0].mxu0 %v475
    %v1178 = vpop.f32.mrb[0].mxu0
    %v1179 = vadd.f32 %v985, %v1178
    %v1180 = vpop.f32.mrb[0].mxu0
    %1181 = vmatprep.mubr.f32.mxu0 0.0
    %1182 = vmatmul.mubr.f32.gmra.mrb[0].mxu0 %v478
    %v1183 = vpop.f32.mrb[0].mxu0
    %v1184 = vadd.f32 %v985, %v1183
    %v1185 = vpop.f32.mrb[0].mxu0
    %1186 = vmatprep.mubr.f32.mxu0 0.0
    %1187 = vmatmul.mubr.f32.gmra.mrb[0].mxu0 %v481
    %v1188 = vpop.f32.mrb[0].mxu0
    %v1189 = vadd.f32 %v985, %v1188
    %v1190 = vpop.f32.mrb[0].mxu0
    %1191 = vmatprep.mubr.f32.mxu0 0.0
    %1192 = vmatmul.mubr.f32.gmra.mrb[0].mxu0 %v484
    %v1193 = vpop.f32.mrb[0].mxu0
    %v1194 = vadd.f32 %v985, %v1193
    %v1195 = vpop.f32.mrb[0].mxu0
    %1196 = vmatprep.mubr.f32.mxu0 0.0
    %1197 = vmatmul.mubr.f32.gmra.mrb[0].mxu0 %v487
    %v1198 = vpop.f32.mrb[0].mxu0
    %v1199 = vadd.f32 %v985, %v1198
    %v1200 = vpop.f32.mrb[0].mxu0
    %1201 = vmatprep.mubr.f32.mxu0 0.0
    %1202 = vmatmul.mubr.f32.gmra.mrb[0].mxu0 %v490
    %v1203 = vpop.f32.mrb[0].mxu0
    %v1204 = vadd.f32 %v985, %v1203
    %v1205 = vpop.f32.mrb[0].mxu0
    %1206 = vmatprep.mubr.f32.mxu0 0.0
    %1207 = vmatmul.mubr.f32.gmra.mrb[0].mxu0 %v493
    %v1208 = vpop.f32.mrb[0].mxu0
    %v1209 = vadd.f32 %v985, %v1208
    %v1210 = vpop.f32.mrb[0].mxu0
    %1211 = vdwg.mxu0
    %vm1212 = vcmask 130048
    %1213 = vst.msk [vmem:[%s8] sm:$0xff] %vm1212, %v1054
    %1214 = vst.msk [vmem:[%s8 + $0x8] sm:$0xff] %vm1212, %v1059
    %1215 = vst.msk [vmem:[%s8 + $0x10] sm:$0xff] %vm1212, %v1064
    %1216 = vst.msk [vmem:[%s8 + $0x18] sm:$0xff] %vm1212, %v1069
    %1217 = vst.msk [vmem:[%s8 + $0x20] sm:$0xff] %vm1212, %v1074
    %1218 = vst.msk [vmem:[%s8 + $0x28] sm:$0xff] %vm1212, %v1079
    %1219 = vst.msk [vmem:[%s8 + $0x30] sm:$0xff] %vm1212, %v1084
    %1220 = vst.msk [vmem:[%s8 + $0x38] sm:$0xff] %vm1212, %v1089
    %1221 = vst.msk [vmem:[%s8 + $0x40] sm:$0xff] %vm1212, %v1094
    %1222 = vst.msk [vmem:[%s8 + $0x48] sm:$0xff] %vm1212, %v1099
    %1223 = vst.msk [vmem:[%s8 + $0x50] sm:$0xff] %vm1212, %v1104
    %1224 = vst.msk [vmem:[%s8 + $0x58] sm:$0xff] %vm1212, %v1109
    %1225 = vst.msk [vmem:[%s8 + $0x60] sm:$0xff] %vm1212, %v1114
    %1226 = vst.msk [vmem:[%s8 + $0x68] sm:$0xff] %vm1212, %v1119
    %1227 = vst.msk [vmem:[%s8 + $0x70] sm:$0xff] %vm1212, %v1124
    %1228 = vst.msk [vmem:[%s8 + $0x78] sm:$0xff] %vm1212, %v1129
    %1229 = vst.msk [vmem:[%s8 + $0x80] sm:$0xff] %vm1212, %v1134
    %1230 = vst.msk [vmem:[%s8 + $0x88] sm:$0xff] %vm1212, %v1139
    %1231 = vst.msk [vmem:[%s8 + $0x90] sm:$0xff] %vm1212, %v1144
    %1232 = vst.msk [vmem:[%s8 + $0x98] sm:$0xff] %vm1212, %v1149
    %1233 = vst.msk [vmem:[%s8 + $0xa0] sm:$0xff] %vm1212, %v1154
    %1234 = vst.msk [vmem:[%s8 + $0xa8] sm:$0xff] %vm1212, %v1159
    %1235 = vst.msk [vmem:[%s8 + $0xb0] sm:$0xff] %vm1212, %v1164
    %1236 = vst.msk [vmem:[%s8 + $0xb8] sm:$0xff] %vm1212, %v1169
    %1237 = vst.msk [vmem:[%s8 + $0xc0] sm:$0xff] %vm1212, %v1174
    %1238 = vst.msk [vmem:[%s8 + $0xc8] sm:$0xff] %vm1212, %v1179
    %1239 = vst.msk [vmem:[%s8 + $0xd0] sm:$0xff] %vm1212, %v1184
    %1240 = vst.msk [vmem:[%s8 + $0xd8] sm:$0xff] %vm1212, %v1189
    %1241 = vst.msk [vmem:[%s8 + $0xe0] sm:$0xff] %vm1212, %v1194
    %1242 = vst.msk [vmem:[%s8 + $0xe8] sm:$0xff] %vm1212, %v1199
    %1243 = vst.msk [vmem:[%s8 + $0xf0] sm:$0xff] %vm1212, %v1204
    %1244 = vst.msk [vmem:[%s8 + $0xf8] sm:$0xff] %vm1212, %v1209
    // Predicated region
    $region30: #{tpu_custom_call.1} parent=1 // pred_check
      _
    $region31: #{tpu_custom_call.1} parent=1 // pred_check_branch
      %1246 = sbr.rel (0) target = $region33
    $region32: #{tpu_custom_call.1} parent=1 // pred_region
      %s1248 = ssub.s32 4096, 4096
      %1249 = vsyncadd [#allocation3], %s1248
      %s1250 = sshll.u32 [#allocation2], 4
      %s1251 = int_to_ptr.vmem [resolvable:$true] %s1250
      %1256 = dma.vmem_to_hbm [thread:$0]  %s1251, 4096, %s7, [#allocation3], 128, 128, 8
    $region33: #{tpu_custom_call.1} parent=1 // pred_fallthru
      _
    // Predicated region
    $region34: #{tpu_custom_call.1} parent=1 // pred_check
      _
    $region35: #{tpu_custom_call.1} parent=1 // pred_check_branch
      %1258 = sbr.rel (0) target = $region37
    $region36: #{tpu_custom_call.1} parent=1 // pred_region
      _
    $region37: #{tpu_custom_call.1} parent=1 // pred_fallthru
      _
    // Predicated region
    $region38: #{tpu_custom_call.1} parent=1 // pred_check
      _
    $region39: #{tpu_custom_call.1} parent=1 // pred_check_branch
      %1260 = sbr.rel (0) target = $region41
    $region40: #{tpu_custom_call.1} parent=1 // pred_region
      %1261 = dma.done [#allocation3], 4096
    $region41: #{tpu_custom_call.1} parent=1 // pred_fallthru
      _
    // Predicated region
    $region42: #{tpu_custom_call.1} parent=1 // pred_check
      _
    $region43: #{tpu_custom_call.1} parent=1 // pred_check_branch
      %1263 = sbr.rel (0) target = $region45
    $region44: #{tpu_custom_call.1} parent=1 // pred_region
      _
    $region45: #{tpu_custom_call.1} parent=1 // pred_fallthru
      _
    %1264 = vsyncpa [#allocation3], 1

</llo_original>
